<compile_context>
chip_gen: v7x
topology: tpu7x:2x2x1
jax: 0.10.0
libtpu: 0.0.40
codegen_flags: <defaults>
</compile_context>

<pallas_src>
import functools

import jax
import jax.numpy as jnp
from jax.experimental import pallas as pl
from jax.experimental.pallas import tpu as pltpu

# ----------------------------- problem sizes ------------------------------
DOF = 2          # inp_dim[0]
ND = 2           # inp_dim[1]  (dq dimension)
NA = 1           # inp_dim[2]  (action dimension)
OUP = 4          # oup_dims    (fk output dimension)
MID = 32         # mid_channels
NUM_LAYERS = 3   # num_layers

IN1 = DOF * 2 + ND + NA      # mlp1 input dim  (= 7)
OUT1 = DOF + ND              # mlp1 output dim (= 4)
IN2 = DOF * 2                # mlp2 input dim  (= 4)

PACK = 8                     # packed input / output lane width
assert DOF + ND + NA <= PACK and OUT1 + OUP <= PACK

# Packed-slab layout: every block starts on an 8-row boundary so every
# in-kernel slice is an aligned, full-width view (no relayouts).
_SLAB_LAYOUT = (
    ("w1s", 8),    # rows 0..DOF-1 : w10 rows for sin(q)  (lane-aligned to x)
    ("w1c", 8),    # rows 0..DOF-1 : w10 rows for cos(q)
    ("w1l", 8),    # rows DOF..DOF+ND : w10 rows for dq and act
    ("b10", 8),    # row 0
    ("w11", MID),
    ("b11", 8),
    ("w12", MID),  # columns 0..OUT1-1 real, rest zero
    ("b12", 8),
    ("w2s", 8),    # rows 0..DOF-1 : w20 rows for sin(new_q)
    ("w2c", 8),    # rows 0..DOF-1 : w20 rows for cos(new_q)
    ("b20", 8),
    ("w21", MID),
    ("b21", 8),
    ("w22", MID),  # columns OUT1..OUT1+OUP-1 real (fk lands in lanes 4..7)
    ("b22", 8),
)


def _slab_offsets():
    offs, row = {}, 0
    for name, n in _SLAB_LAYOUT:
        offs[name] = row
        row += n
    return offs, row


SLAB_ROWS = _slab_offsets()[1]   # = 216


# ------------------------------- the kernel -------------------------------
def _mlp_acrobat_kernel(inp_ref, slab_ref, out_ref, *, offs):
    f32 = jnp.float32
    b = inp_ref.shape[0]

    def wblk(name, rows):                 # 8-row-aligned, full-width slab view
        o = offs[name]
        return slab_ref[o:o + rows, :]

    def bias(name):                       # (1, MID) row -> sublane-broadcast add
        o = offs[name]
        return slab_ref[o:o + 1, :]

    x = inp_ref[...]                      # (B, 8) = [q | dq | act | 0]
    sx = jnp.sin(x)
    cx = jnp.cos(x)

    # ---- mlp1 layer 0: cat(sin q, cos q, dq, act) @ W10 done as three K=8
    #      MXU dots against lane-aligned, zero-padded weight row blocks.
    h = (jnp.dot(sx, wblk("w1s", PACK), preferred_element_type=f32)
         + jnp.dot(cx, wblk("w1c", PACK), preferred_element_type=f32)
         + jnp.dot(x, wblk("w1l", PACK), preferred_element_type=f32)
         + bias("b10"))
    h = jnp.maximum(h, 0.0)

    # ---- mlp1 layers 1, 2 on the MXU (K = 32)
    h = jnp.maximum(
        jnp.dot(h, wblk("w11", MID), preferred_element_type=f32) + bias("b11"),
        0.0)
    delta = jnp.dot(h, wblk("w12", MID), preferred_element_type=f32) + bias("b12")
    # delta lanes OUT1..31 are exactly zero (w12 / b12 have zero-padded columns).

    nf = x + delta[:, :PACK]              # lanes 0..3 = new_state; lanes 4..7 unused

    # ---- mlp2 (fk): cat(sin new_q, cos new_q) @ W20 with the same trick.
    sn = jnp.sin(nf)
    cn = jnp.cos(nf)
    g = (jnp.dot(sn, wblk("w2s", PACK), preferred_element_type=f32)
         + jnp.dot(cn, wblk("w2c", PACK), preferred_element_type=f32)
         + bias("b20"))
    g = jnp.maximum(g, 0.0)

    g = jnp.maximum(
        jnp.dot(g, wblk("w21", MID), preferred_element_type=f32) + bias("b21"),
        0.0)
    fk = jnp.dot(g, wblk("w22", MID), preferred_element_type=f32) + bias("b22")
    # fk lanes OUT1..OUT1+OUP-1 hold the fk output (w22 / b22 shifted there).

    # ---- single lane-dense (B, 8) store: [new_state | fk]
    lane = jax.lax.broadcasted_iota(jnp.int32, (b, PACK), 1)
    out_ref[...] = jnp.where(lane < OUT1, nf, fk[:, :PACK])


# ------------------------------ wrapper ------------------------------------
def pack_inputs(state, action):
    """Pack state and action into one (B, 8) f32 block [q | dq | act | pad]."""
    b = state.shape[0]
    pad = jnp.zeros((b, PACK - (DOF + ND + NA)), jnp.float32)
    return jnp.concatenate(
        [state.astype(jnp.float32), action.astype(jnp.float32), pad], axis=-1)


def mlp_acrobat_forward(state, action, slab, *, batch_tile=None):
    """slab is the fixed (216, 32) tensor produced by pack_params()."""
    b = state.shape[0]
    inp = pack_inputs(state, action)
    offs, rows = _slab_offsets()
    assert slab.shape == (rows, MID)
    kernel = functools.partial(_mlp_acrobat_kernel, offs=offs)

    cost = pl.CostEstimate(
        flops=2 * b * (5 * PACK * MID + 4 * MID * MID),
        transcendentals=4 * PACK * b,
        bytes_accessed=4 * (2 * b * PACK + slab.size),
    )
    out_shape = jax.ShapeDtypeStruct((b, PACK), jnp.float32)

    if batch_tile is None or batch_tile >= b:
        # Grid-less full-array call: right shape for small batches.
        vmem = pl.BlockSpec(memory_space=pltpu.MemorySpace.VMEM)
        out = pl.pallas_call(
            kernel,
            out_shape=out_shape,
            in_specs=[vmem, vmem],
            out_specs=vmem,
            cost_estimate=cost,
        )(inp, slab)
    else:
        # 1-D parallel batch grid; slab block is constant -> stays resident.
        assert b % batch_tile == 0 and batch_tile % 8 == 0
        out = pl.pallas_call(
            kernel,
            out_shape=out_shape,
            grid=(b // batch_tile,),
            in_specs=[
                pl.BlockSpec((batch_tile, PACK), lambda i: (i, 0)),
                pl.BlockSpec((rows, MID), lambda i: (0, 0)),
            ],
            out_specs=pl.BlockSpec((batch_tile, PACK), lambda i: (i, 0)),
            compiler_params=pltpu.CompilerParams(
                dimension_semantics=("parallel",)),
            cost_estimate=cost,
        )(inp, slab)

    new_state = out[:, :OUT1]
    fk = out[:, OUT1:OUT1 + OUP]
    return new_state, fk


# ------------------------- parameter construction --------------------------
def _linear_params(key, fan_in, fan_out):
    kw, kb = jax.random.split(key)
    bound = 1.0 / jnp.sqrt(jnp.float32(fan_in))
    # stored as (in, out) so the math is x @ W + b
    w = jax.random.uniform(kw, (fan_in, fan_out), jnp.float32, -bound, bound)
    bvec = jax.random.uniform(kb, (1, fan_out), jnp.float32, -bound, bound)
    return w, bvec


def make_params(key):
    ks = jax.random.split(key, 6)
    # mlp1: IN1 -> MID -> MID -> OUT1
    w10, b10 = _linear_params(ks[0], IN1, MID)
    w11, b11 = _linear_params(ks[1], MID, MID)
    w12, b12 = _linear_params(ks[2], MID, OUT1)
    # mlp2: IN2 -> MID -> MID -> OUP
    w20, b20 = _linear_params(ks[3], IN2, MID)
    w21, b21 = _linear_params(ks[4], MID, MID)
    w22, b22 = _linear_params(ks[5], MID, OUP)
    return (w10, b10, w11, b11, w12, b12, w20, b20, w21, b21, w22, b22)


def pack_params(params):
    """Pack the 12 parameter tensors into one fixed (216, 32) f32 slab."""
    (w10, b10, w11, b11, w12, b12, w20, b20, w21, b21, w22, b22) = params

    def placed(rows, w, row0=0, col0=0):
        blk = jnp.zeros((rows, MID), jnp.float32)
        r, c = w.shape
        return blk.at[row0:row0 + r, col0:col0 + c].set(w.astype(jnp.float32))

    blocks = {
        # x lanes: [q(0..1) | dq(2..3) | act(4) | pad]
        "w1s": placed(8, w10[0:DOF]),                              # sin(q) rows
        "w1c": placed(8, w10[DOF:2 * DOF]),                        # cos(q) rows
        "w1l": placed(8, w10[2 * DOF:2 * DOF + ND + NA], row0=DOF),  # dq + act rows
        "b10": placed(8, b10),
        "w11": placed(MID, w11),
        "b11": placed(8, b11),
        "w12": placed(MID, w12),                                   # cols 0..OUT1-1
        "b12": placed(8, b12),
        "w2s": placed(8, w20[0:DOF]),                              # sin(new_q) rows
        "w2c": placed(8, w20[DOF:2 * DOF]),                        # cos(new_q) rows
        "b20": placed(8, b20),
        "w21": placed(MID, w21),
        "b21": placed(8, b21),
        "w22": placed(MID, w22, col0=OUT1),                        # cols 4..7 -> fk lanes
        "b22": placed(8, b22, col0=OUT1),
    }
    slab = jnp.concatenate([blocks[name] for name, _ in _SLAB_LAYOUT], axis=0)
    assert slab.shape == (SLAB_ROWS, MID)
    return slab


# --------------------------- plain-JAX reference ----------------------------
def reference_forward(state, action, params):
    (w10, b10, w11, b11, w12, b12, w20, b20, w21, b21, w22, b22) = params

    def wrap(q):
        return jnp.concatenate((jnp.sin(q), jnp.cos(q)), axis=-1)

    def mlp(x, layers):
        for i, (w, b) in enumerate(layers):
            x = x @ w + b
            if i < len(layers) - 1:
                x = jnp.maximum(x, 0.0)
        return x

    q, dq = state[..., :DOF], state[..., DOF:]
    inp = jnp.concatenate((wrap(q), dq, action), axis=-1)
    delta = mlp(inp, [(w10, b10), (w11, b11), (w12, b12)])
    new_q = q + delta[..., :DOF]
    new_dq = dq + delta[..., DOF:]
    new_state = jnp.concatenate((new_q, new_dq), axis=-1)
    fk = mlp(wrap(new_q), [(w20, b20), (w21, b21), (w22, b22)])
    return new_state, fk


# --------------------------------- main -------------------------------------
if __name__ == "__main__":
    key = jax.random.PRNGKey(0)
    k_state, k_action, k_params, k_state2, k_action2 = jax.random.split(key, 5)

    params = make_params(k_params)
    slab = pack_params(params)

    # ---- small batch: grid-less full-array call
    B = 8
    state = jax.random.normal(k_state, (B, DOF + ND), jnp.float32)
    action = jax.random.normal(k_action, (B, NA), jnp.float32)

    new_state, fk = mlp_acrobat_forward(state, action, slab)
    jax.block_until_ready((new_state, fk))

    ref_state, ref_fk = reference_forward(state, action, params)
    assert jnp.allclose(new_state, ref_state, atol=1e-5, rtol=1e-5)
    assert jnp.allclose(fk, ref_fk, atol=1e-5, rtol=1e-5)

    # ---- larger batch: 1-D parallel batch grid with a resident slab block
    B2, TB = 64, 16
    state2 = jax.random.normal(k_state2, (B2, DOF + ND), jnp.float32)
    action2 = jax.random.normal(k_action2, (B2, NA), jnp.float32)

    new_state2, fk2 = mlp_acrobat_forward(state2, action2, slab, batch_tile=TB)
    jax.block_until_ready((new_state2, fk2))

    ref_state2, ref_fk2 = reference_forward(state2, action2, params)
    assert jnp.allclose(new_state2, ref_state2, atol=1e-5, rtol=1e-5)
    assert jnp.allclose(fk2, ref_fk2, atol=1e-5, rtol=1e-5)

    print("KERNEL_OK")
</pallas_src>

<mosaic_0001>
module attributes {stable_mosaic.version = 11 : i64} {
  func.func @_mlp_acrobat_kernel(%arg0: memref<8x8xf32, #tpu.memory_space<vmem>>, %arg1: memref<216x32xf32, #tpu.memory_space<vmem>>, %arg2: memref<8x8xf32, #tpu.memory_space<vmem>>) attributes {dimension_semantics = [], scalar_prefetch = 0 : i64, scratch_operands = 0 : i64, tpu.core_type = #tpu.core_type<tc>} {
    %c0 = arith.constant 0 : index
    %c0_0 = arith.constant 0 : index
    %0 = vector.load %arg0[%c0, %c0_0] : memref<8x8xf32, #tpu.memory_space<vmem>>, vector<8x8xf32>
    %1 = math.sin %0 : vector<8x8xf32>
    %2 = math.cos %0 : vector<8x8xf32>
    %c0_1 = arith.constant 0 : index
    %c0_2 = arith.constant 0 : index
    %3 = vector.load %arg1[%c0_1, %c0_2] : memref<216x32xf32, #tpu.memory_space<vmem>>, vector<8x32xf32>
    %cst = arith.constant dense<0.000000e+00> : vector<8x32xf32>
    %4 = tpu.matmul %1, %3, %cst {dimension_numbers = #tpu.dot_dimension_numbers<[1], [0], [0], [1], [0, 0, 1, 1], [], []>} : vector<8x8xf32>, vector<8x32xf32>, vector<8x32xf32> -> vector<8x32xf32>
    %c8 = arith.constant 8 : index
    %c0_3 = arith.constant 0 : index
    %5 = vector.load %arg1[%c8, %c0_3] : memref<216x32xf32, #tpu.memory_space<vmem>>, vector<8x32xf32>
    %cst_4 = arith.constant dense<0.000000e+00> : vector<8x32xf32>
    %6 = tpu.matmul %2, %5, %cst_4 {dimension_numbers = #tpu.dot_dimension_numbers<[1], [0], [0], [1], [0, 0, 1, 1], [], []>} : vector<8x8xf32>, vector<8x32xf32>, vector<8x32xf32> -> vector<8x32xf32>
    %7 = arith.addf %4, %6 : vector<8x32xf32>
    %c16 = arith.constant 16 : index
    %c0_5 = arith.constant 0 : index
    %8 = vector.load %arg1[%c16, %c0_5] : memref<216x32xf32, #tpu.memory_space<vmem>>, vector<8x32xf32>
    %cst_6 = arith.constant dense<0.000000e+00> : vector<8x32xf32>
    %9 = tpu.matmul %0, %8, %cst_6 {dimension_numbers = #tpu.dot_dimension_numbers<[1], [0], [0], [1], [0, 0, 1, 1], [], []>} : vector<8x8xf32>, vector<8x32xf32>, vector<8x32xf32> -> vector<8x32xf32>
    %10 = arith.addf %7, %9 : vector<8x32xf32>
    %c24 = arith.constant 24 : index
    %c0_7 = arith.constant 0 : index
    %11 = vector.load %arg1[%c24, %c0_7] : memref<216x32xf32, #tpu.memory_space<vmem>>, vector<1x32xf32>
    %12 = vector.broadcast %11 : vector<1x32xf32> to vector<8x32xf32>
    %13 = arith.addf %10, %12 : vector<8x32xf32>
    %cst_8 = arith.constant 0.000000e+00 : f32
    %14 = vector.broadcast %cst_8 : f32 to vector<8x32xf32>
    %15 = arith.maximumf %13, %14 : vector<8x32xf32>
    %c32 = arith.constant 32 : index
    %c0_9 = arith.constant 0 : index
    %16 = vector.load %arg1[%c32, %c0_9] : memref<216x32xf32, #tpu.memory_space<vmem>>, vector<32x32xf32>
    %cst_10 = arith.constant dense<0.000000e+00> : vector<8x32xf32>
    %17 = tpu.matmul %15, %16, %cst_10 {dimension_numbers = #tpu.dot_dimension_numbers<[1], [0], [0], [1], [0, 0, 1, 1], [], []>} : vector<8x32xf32>, vector<32x32xf32>, vector<8x32xf32> -> vector<8x32xf32>
    %c64 = arith.constant 64 : index
    %c0_11 = arith.constant 0 : index
    %18 = vector.load %arg1[%c64, %c0_11] : memref<216x32xf32, #tpu.memory_space<vmem>>, vector<1x32xf32>
    %19 = vector.broadcast %18 : vector<1x32xf32> to vector<8x32xf32>
    %20 = arith.addf %17, %19 : vector<8x32xf32>
    %cst_12 = arith.constant 0.000000e+00 : f32
    %21 = vector.broadcast %cst_12 : f32 to vector<8x32xf32>
    %22 = arith.maximumf %20, %21 : vector<8x32xf32>
    %c72 = arith.constant 72 : index
    %c0_13 = arith.constant 0 : index
    %23 = vector.load %arg1[%c72, %c0_13] : memref<216x32xf32, #tpu.memory_space<vmem>>, vector<32x32xf32>
    %cst_14 = arith.constant dense<0.000000e+00> : vector<8x32xf32>
    %24 = tpu.matmul %22, %23, %cst_14 {dimension_numbers = #tpu.dot_dimension_numbers<[1], [0], [0], [1], [0, 0, 1, 1], [], []>} : vector<8x32xf32>, vector<32x32xf32>, vector<8x32xf32> -> vector<8x32xf32>
    %c104 = arith.constant 104 : index
    %c0_15 = arith.constant 0 : index
    %25 = vector.load %arg1[%c104, %c0_15] : memref<216x32xf32, #tpu.memory_space<vmem>>, vector<1x32xf32>
    %26 = vector.broadcast %25 : vector<1x32xf32> to vector<8x32xf32>
    %27 = arith.addf %24, %26 : vector<8x32xf32>
    %28 = vector.extract_strided_slice %27 {offsets = [0, 0], sizes = [8, 8], strides = [1, 1]} : vector<8x32xf32> to vector<8x8xf32>
    %29 = arith.addf %0, %28 : vector<8x8xf32>
    %30 = math.sin %29 : vector<8x8xf32>
    %31 = math.cos %29 : vector<8x8xf32>
    %c112 = arith.constant 112 : index
    %c0_16 = arith.constant 0 : index
    %32 = vector.load %arg1[%c112, %c0_16] : memref<216x32xf32, #tpu.memory_space<vmem>>, vector<8x32xf32>
    %cst_17 = arith.constant dense<0.000000e+00> : vector<8x32xf32>
    %33 = tpu.matmul %30, %32, %cst_17 {dimension_numbers = #tpu.dot_dimension_numbers<[1], [0], [0], [1], [0, 0, 1, 1], [], []>} : vector<8x8xf32>, vector<8x32xf32>, vector<8x32xf32> -> vector<8x32xf32>
    %c120 = arith.constant 120 : index
    %c0_18 = arith.constant 0 : index
    %34 = vector.load %arg1[%c120, %c0_18] : memref<216x32xf32, #tpu.memory_space<vmem>>, vector<8x32xf32>
    %cst_19 = arith.constant dense<0.000000e+00> : vector<8x32xf32>
    %35 = tpu.matmul %31, %34, %cst_19 {dimension_numbers = #tpu.dot_dimension_numbers<[1], [0], [0], [1], [0, 0, 1, 1], [], []>} : vector<8x8xf32>, vector<8x32xf32>, vector<8x32xf32> -> vector<8x32xf32>
    %36 = arith.addf %33, %35 : vector<8x32xf32>
    %c128 = arith.constant 128 : index
    %c0_20 = arith.constant 0 : index
    %37 = vector.load %arg1[%c128, %c0_20] : memref<216x32xf32, #tpu.memory_space<vmem>>, vector<1x32xf32>
    %38 = vector.broadcast %37 : vector<1x32xf32> to vector<8x32xf32>
    %39 = arith.addf %36, %38 : vector<8x32xf32>
    %cst_21 = arith.constant 0.000000e+00 : f32
    %40 = vector.broadcast %cst_21 : f32 to vector<8x32xf32>
    %41 = arith.maximumf %39, %40 : vector<8x32xf32>
    %c136 = arith.constant 136 : index
    %c0_22 = arith.constant 0 : index
    %42 = vector.load %arg1[%c136, %c0_22] : memref<216x32xf32, #tpu.memory_space<vmem>>, vector<32x32xf32>
    %cst_23 = arith.constant dense<0.000000e+00> : vector<8x32xf32>
    %43 = tpu.matmul %41, %42, %cst_23 {dimension_numbers = #tpu.dot_dimension_numbers<[1], [0], [0], [1], [0, 0, 1, 1], [], []>} : vector<8x32xf32>, vector<32x32xf32>, vector<8x32xf32> -> vector<8x32xf32>
    %c168 = arith.constant 168 : index
    %c0_24 = arith.constant 0 : index
    %44 = vector.load %arg1[%c168, %c0_24] : memref<216x32xf32, #tpu.memory_space<vmem>>, vector<1x32xf32>
    %45 = vector.broadcast %44 : vector<1x32xf32> to vector<8x32xf32>
    %46 = arith.addf %43, %45 : vector<8x32xf32>
    %cst_25 = arith.constant 0.000000e+00 : f32
    %47 = vector.broadcast %cst_25 : f32 to vector<8x32xf32>
    %48 = arith.maximumf %46, %47 : vector<8x32xf32>
    %c176 = arith.constant 176 : index
    %c0_26 = arith.constant 0 : index
    %49 = vector.load %arg1[%c176, %c0_26] : memref<216x32xf32, #tpu.memory_space<vmem>>, vector<32x32xf32>
    %cst_27 = arith.constant dense<0.000000e+00> : vector<8x32xf32>
    %50 = tpu.matmul %48, %49, %cst_27 {dimension_numbers = #tpu.dot_dimension_numbers<[1], [0], [0], [1], [0, 0, 1, 1], [], []>} : vector<8x32xf32>, vector<32x32xf32>, vector<8x32xf32> -> vector<8x32xf32>
    %c208 = arith.constant 208 : index
    %c0_28 = arith.constant 0 : index
    %51 = vector.load %arg1[%c208, %c0_28] : memref<216x32xf32, #tpu.memory_space<vmem>>, vector<1x32xf32>
    %52 = vector.broadcast %51 : vector<1x32xf32> to vector<8x32xf32>
    %53 = arith.addf %50, %52 : vector<8x32xf32>
    %54 = tpu.iota {dimensions = array<i32: 1>} : vector<8x8xi32>
    %c4_i32 = arith.constant 4 : i32
    %55 = vector.broadcast %c4_i32 : i32 to vector<8x8xi32>
    %56 = arith.cmpi slt, %54, %55 : vector<8x8xi32>
    %57 = vector.extract_strided_slice %53 {offsets = [0, 0], sizes = [8, 8], strides = [1, 1]} : vector<8x32xf32> to vector<8x8xf32>
    %58 = arith.select %56, %29, %57 : vector<8x8xi1>, vector<8x8xf32>
    %c0_29 = arith.constant 0 : index
    %c0_30 = arith.constant 0 : index
    %59 = vector.load %arg2[%c0_29, %c0_30] : memref<8x8xf32, #tpu.memory_space<vmem>>, vector<8x8xf32>
    tpu.vector_store %arg2[%c0_29, %c0_30], %58 {strides = array<i32>} : memref<8x8xf32, #tpu.memory_space<vmem>>, vector<8x8xf32>,
    return
  }
}

</mosaic_0001>

<llo_original>
// kernel: tpu_custom_call.1
$region0: #{tpu_custom_call.1}
  #allocation0 [shape = 'u32[]', space=smem, size = 0x4, offset = 0x4, fixed_abs, tag = 'smem constant byte address 0x4 - core index']
  #allocation1 [shape = 'u32[144,128]{1,0:T(1,128)}', space=vmem, size = 0x12000, scoped, tag = 'internal scratch']
  %s0 = inlined_call_operand.vmem [shape: f32[8,8], index: 0, kind: input, shape index: {}]
  %s1 = inlined_call_operand.vmem [shape: f32[216,32], index: 1, kind: input, shape index: {}]
  %s2 = inlined_call_operand.hbm [shape: f32[8,8], index: 2, kind: output, shape index: {}]
  %s3 = sld [smem:[#allocation0]]
  $region18: #{tpu_custom_call.1} parent=0
    _
  %s5 = ssub.s32 1, %s3
  %s6 = scalar_select 0, %s5, %s3
  $region1: #{tpu_custom_call.1} parent=0
    #allocation2 [shape = 'u8[4096]{0}', space=vmem, size = 0x1000, scoped, tag = 'output window, operand 0, single buffered']
    #allocation3 [shape = 's32[1]{0}', space=sflag, size = 0x4, scoped, tag = 'scoped memory for tpu_custom_call.1']
    %7 = vsyncpa [#allocation3], 0
    // Predicated region
    $region2: #{tpu_custom_call.1} parent=1 // pred_check
      _
    $region3: #{tpu_custom_call.1} parent=1 // pred_check_branch
      %9 = sbr.rel (0) target = $region5
    $region4: #{tpu_custom_call.1} parent=1 // pred_region
      _
    $region5: #{tpu_custom_call.1} parent=1 // pred_fallthru
      _
    // Predicated region
    $region6: #{tpu_custom_call.1} parent=1 // pred_check
      _
    $region7: #{tpu_custom_call.1} parent=1 // pred_check_branch
      %11 = sbr.rel (0) target = $region9
    $region8: #{tpu_custom_call.1} parent=1 // pred_region
      _
    $region9: #{tpu_custom_call.1} parent=1 // pred_fallthru
      _
    %v12 = vld [vmem:[%s0] sm:$0xff]
    %v13 = vand.u32 2147483647, %v12
    %vm14 = vcmp.le.f32.partialorder %v13, 0.7853982
    %vm15 = vcmp.lt.s32.totalorder %v12, 0
    %v16 = vand.u32 %v12, 2139095040
    %v17 = vshrl.u32 %v16, 23
    %v18 = vsub.s32 %v17, 127
    %v19 = vand.u32 2147483647, %v12
    %v20 = vand.u32 %v19, 8388607
    %v21 = vor.u32 %v20, 8388608
    %v22 = vsub.s32 0, %v21
    %v23 = vadd.s32 %v18, 1
    %vm24 = vcmp.gt.s32.totalorder %v23, 0
    %v25 = vsel %vm24, %v23, 0
    %v26 = vshrl.u32 %v25, 5
    %v27 = vand.u32 %v25, 31
    %v28 = vsub.s32 32, %v27
    %v29 = vshrl.u32 683565275, %v28
    %v30 = vshll.u32 683565275, %v27
    %v31 = vshrl.u32 2475754826, %v28
    %v32 = vor.u32 %v30, %v31
    %v33 = vshll.u32 2475754826, %v27
    %v34 = vshrl.u32 2131351028, %v28
    %v35 = vor.u32 %v33, %v34
    %v36 = vshll.u32 2131351028, %v27
    %v37 = vshrl.u32 2102212464, %v28
    %v38 = vor.u32 %v36, %v37
    %v39 = vshll.u32 2102212464, %v27
    %v40 = vshrl.u32 920167782, %v28
    %v41 = vor.u32 %v39, %v40
    %v42 = vshll.u32 920167782, %v27
    %v43 = vshrl.u32 1326507024, %v28
    %v44 = vor.u32 %v42, %v43
    %vm45 = vcmp.lt.s32.totalorder %v26, 1
    %vm46 = vcmp.lt.s32.totalorder %v26, 2
    %vm47 = vcmp.lt.s32.totalorder %v26, 3
    %vm48 = vcmp.lt.s32.totalorder %v26, 4
    %v49 = vsel %vm45, %v29, %v32
    %v50 = vsel %vm48, %v38, 2102212464
    %v51 = vsel %vm47, %v35, %v50
    %v52 = vsel %vm46, %v49, %v51
    %v53 = vsel %vm45, %v32, %v35
    %v54 = vsel %vm48, %v41, 920167782
    %v55 = vsel %vm47, %v38, %v54
    %v56 = vsel %vm46, %v53, %v55
    %v57 = vsel %vm45, %v35, %v38
    %v58 = vsel %vm48, %v44, 1326507024
    %v59 = vsel %vm47, %v41, %v58
    %v60 = vsel %vm46, %v57, %v59
    %v61 = vshll.u32 %v21, 8
    %v62 = vmul.u32.u64.compose %v61, %v60
    %v63 = vextract.low.u32 %v62
    %v64 = vextract.high.u32 %v62
    %v65 = vmul.u32.u64.compose %v61, %v56
    %v66 = vextract.low.u32 %v65
    %v67 = vextract.high.u32 %v65
    %v68 = vmul.u32 %v61, %v52
    %v69 = vadd.s32 %v64, %v66
    %vm70 = vc.u32 %v64, %v66
    %v71 = vadd.s32 %v67, 1
    %v72 = vsel %vm70, %v71, %v67
    %v73 = vadd.s32 %v68, %v72
    %v74 = vadd.s32 %v73, 536870912
    %v75 = vshrl.u32 %v74, 30
    %v76 = vshll.u32 %v75, 30
    %v77 = vsub.s32 %v73, %v76
    %vm78 = vcmp.lt.s32.totalorder %v77, 0
    %v79 = vsub.s32 0, %v77
    %v80 = vsel %vm78, %v79, %v77
    %v81 = vclz %v80
    %v82 = vsub.s32 %v81, 2
    %vm83 = vcmp.gt.s32.totalorder 0, %v82
    %v84 = vsel %vm83, 0, %v82
    %v85 = vsub.s32 32, %v84
    %v86 = vshll.u32 %v77, %v84
    %v87 = vshrl.u32 %v69, %v85
    %v88 = vor.u32 %v86, %v87
    %v89 = vsub.s32 4294967266, %v84
    %v90 = vadd.s32 %v89, 127
    %v91 = vshll.u32 %v90, 23
    %v92 = vor.u32 4788187, %v91
    %v93 = vand.u32 2147483647, %v92
    %v95 = vcvt.s32.f32 %v88
    %v96 = vmul.f32 %v95, %v93
    %v97 = vxor.u32 %v96, 2147483648
    %v98 = vsel %vm15, %v97, %v96
    %v99 = vsub.s32 4, %v75
    %v100 = vsel %vm15, %v99, %v75
    %v101 = vsel %vm14, %v12, %v98
    %v102 = vsel %vm14, 0, %v100
    %v103 = vcosq.f32.pop %v101
    %v104 = vsinq.f32.pop %v101
    %vm105 = vweird.f32 %v12
    %v106 = vadd.s32 %v102, 3
    %v107 = vand.u32 %v106, 3
    %vm108 = vcmp.lt.s32.totalorder %v107, 2
    %vm109 = vcmp.eq.s32.totalorder %v107, 0
    %v110 = vxor.u32 %v104, 2147483648
    %v111 = vsel %vm109, %v103, %v110
    %vm112 = vcmp.eq.s32.totalorder %v107, 2
    %v113 = vxor.u32 %v103, 2147483648
    %v114 = vsel %vm112, %v113, %v104
    %v115 = vsel %vm108, %v111, %v114
    %v116 = vsel %vm105, nan, %v115
    %v117 = vand.u32 2147483647, %v12
    %vm118 = vcmp.le.f32.partialorder %v117, 0.7853982
    %vm119 = vcmp.lt.s32.totalorder %v12, 0
    %v120 = vand.u32 %v12, 2139095040
    %v121 = vshrl.u32 %v120, 23
    %v122 = vsub.s32 %v121, 127
    %v123 = vand.u32 2147483647, %v12
    %v124 = vand.u32 %v123, 8388607
    %v125 = vor.u32 %v124, 8388608
    %v126 = vsub.s32 0, %v125
    %v127 = vadd.s32 %v122, 1
    %vm128 = vcmp.gt.s32.totalorder %v127, 0
    %v129 = vsel %vm128, %v127, 0
    %v130 = vshrl.u32 %v129, 5
    %v131 = vand.u32 %v129, 31
    %v132 = vsub.s32 32, %v131
    %v133 = vshrl.u32 683565275, %v132
    %v134 = vshll.u32 683565275, %v131
    %v135 = vshrl.u32 2475754826, %v132
    %v136 = vor.u32 %v134, %v135
    %v137 = vshll.u32 2475754826, %v131
    %v138 = vshrl.u32 2131351028, %v132
    %v139 = vor.u32 %v137, %v138
    %v140 = vshll.u32 2131351028, %v131
    %v141 = vshrl.u32 2102212464, %v132
    %v142 = vor.u32 %v140, %v141
    %v143 = vshll.u32 2102212464, %v131
    %v144 = vshrl.u32 920167782, %v132
    %v145 = vor.u32 %v143, %v144
    %v146 = vshll.u32 920167782, %v131
    %v147 = vshrl.u32 1326507024, %v132
    %v148 = vor.u32 %v146, %v147
    %vm149 = vcmp.lt.s32.totalorder %v130, 1
    %vm150 = vcmp.lt.s32.totalorder %v130, 2
    %vm151 = vcmp.lt.s32.totalorder %v130, 3
    %vm152 = vcmp.lt.s32.totalorder %v130, 4
    %v153 = vsel %vm149, %v133, %v136
    %v154 = vsel %vm152, %v142, 2102212464
    %v155 = vsel %vm151, %v139, %v154
    %v156 = vsel %vm150, %v153, %v155
    %v157 = vsel %vm149, %v136, %v139
    %v158 = vsel %vm152, %v145, 920167782
    %v159 = vsel %vm151, %v142, %v158
    %v160 = vsel %vm150, %v157, %v159
    %v161 = vsel %vm149, %v139, %v142
    %v162 = vsel %vm152, %v148, 1326507024
    %v163 = vsel %vm151, %v145, %v162
    %v164 = vsel %vm150, %v161, %v163
    %v165 = vshll.u32 %v125, 8
    %v166 = vmul.u32.u64.compose %v165, %v164
    %v167 = vextract.low.u32 %v166
    %v168 = vextract.high.u32 %v166
    %v169 = vmul.u32.u64.compose %v165, %v160
    %v170 = vextract.low.u32 %v169
    %v171 = vextract.high.u32 %v169
    %v172 = vmul.u32 %v165, %v156
    %v173 = vadd.s32 %v168, %v170
    %vm174 = vc.u32 %v168, %v170
    %v175 = vadd.s32 %v171, 1
    %v176 = vsel %vm174, %v175, %v171
    %v177 = vadd.s32 %v172, %v176
    %v178 = vadd.s32 %v177, 536870912
    %v179 = vshrl.u32 %v178, 30
    %v180 = vshll.u32 %v179, 30
    %v181 = vsub.s32 %v177, %v180
    %vm182 = vcmp.lt.s32.totalorder %v181, 0
    %v183 = vsub.s32 0, %v181
    %v184 = vsel %vm182, %v183, %v181
    %v185 = vclz %v184
    %v186 = vsub.s32 %v185, 2
    %vm187 = vcmp.gt.s32.totalorder 0, %v186
    %v188 = vsel %vm187, 0, %v186
    %v189 = vsub.s32 32, %v188
    %v190 = vshll.u32 %v181, %v188
    %v191 = vshrl.u32 %v173, %v189
    %v192 = vor.u32 %v190, %v191
    %v193 = vsub.s32 4294967266, %v188
    %v194 = vadd.s32 %v193, 127
    %v195 = vshll.u32 %v194, 23
    %v196 = vor.u32 4788187, %v195
    %v197 = vand.u32 2147483647, %v196
    %v199 = vcvt.s32.f32 %v192
    %v200 = vmul.f32 %v199, %v197
    %v201 = vxor.u32 %v200, 2147483648
    %v202 = vsel %vm119, %v201, %v200
    %v203 = vsub.s32 4, %v179
    %v204 = vsel %vm119, %v203, %v179
    %v205 = vsel %vm118, %v12, %v202
    %v206 = vsel %vm118, 0, %v204
    %v207 = vcosq.f32.pop %v205
    %v208 = vsinq.f32.pop %v205
    %vm209 = vweird.f32 %v12
    %v210 = vand.u32 %v206, 3
    %vm211 = vcmp.lt.s32.totalorder %v210, 2
    %vm212 = vcmp.eq.s32.totalorder %v210, 0
    %v213 = vxor.u32 %v208, 2147483648
    %v214 = vsel %vm212, %v207, %v213
    %vm215 = vcmp.eq.s32.totalorder %v210, 2
    %v216 = vxor.u32 %v207, 2147483648
    %v217 = vsel %vm215, %v216, %v208
    %v218 = vsel %vm211, %v214, %v217
    %v219 = vsel %vm209, nan, %v218
    %v220 = vld [vmem:[%s1] sm:$0xff]
    %v221 = vld [vmem:[%s1 + $0x8] sm:$0xff]
    %vm222 = vcmask 64512
    %v224 = vsel %vm222, %v219, 0
    %226 = vmatprep.subr.mxu0 0.0
    %227 = vmatpush1.msra.mxu0 %v221
    %228 = vmatprep.subr.mxu0 0.0
    %229 = vmatpush1.msra.mxu0 0.0
    %230 = vmatprep.subr.mxu0 0.0
    %231 = vmatpush1.msra.mxu0 0.0
    %232 = vmatprep.subr.mxu0 0.0
    %233 = vmatpush1.msra.mxu0 0.0
    %234 = vmatprep.subr.mxu0 0.0
    %235 = vmatpush1.msra.mxu0 0.0
    %236 = vmatprep.subr.mxu0 0.0
    %237 = vmatpush1.msra.mxu0 0.0
    %238 = vmatprep.subr.mxu0 0.0
    %239 = vmatpush1.msra.mxu0 0.0
    %240 = vmatprep.subr.mxu0 0.0
    %241 = vmatpush1.msra.mxu0 0.0
    %242 = vmatprep.subr.mxu0 0.0
    %243 = vmatpush1.msra.mxu0 0.0
    %244 = vmatprep.subr.mxu0 0.0
    %245 = vmatpush1.msra.mxu0 0.0
    %246 = vmatprep.subr.mxu0 0.0
    %247 = vmatpush1.msra.mxu0 0.0
    %248 = vmatprep.subr.mxu0 0.0
    %249 = vmatpush1.msra.mxu0 0.0
    %250 = vmatprep.subr.mxu0 0.0
    %251 = vmatpush1.msra.mxu0 0.0
    %252 = vmatprep.subr.mxu0 0.0
    %253 = vmatpush1.msra.mxu0 0.0
    %254 = vmatprep.subr.mxu0 0.0
    %255 = vmatpush1.msra.mxu0 0.0
    %256 = vmatprep.subr.mxu0 0.0
    %257 = vmatpush1.msra.mxu0 0.0
    %258 = vmatprep.subr.mxu0 0.0
    %259 = vmatpush1.msra.mxu0 0.0
    %260 = vmatprep.subr.mxu0 0.0
    %261 = vmatpush1.msra.mxu0 0.0
    %262 = vmatprep.subr.mxu0 0.0
    %263 = vmatpush1.msra.mxu0 0.0
    %264 = vmatprep.subr.mxu0 0.0
    %265 = vmatpush1.msra.mxu0 0.0
    %266 = vmatprep.subr.mxu0 0.0
    %267 = vmatpush1.msra.mxu0 0.0
    %268 = vmatprep.subr.mxu0 0.0
    %269 = vmatpush1.msra.mxu0 0.0
    %270 = vmatprep.subr.mxu0 0.0
    %271 = vmatpush1.msra.mxu0 0.0
    %272 = vmatprep.subr.mxu0 0.0
    %273 = vmatpush1.msra.mxu0 0.0
    %274 = vmatprep.subr.mxu0 0.0
    %275 = vmatpush1.msra.mxu0 0.0
    %276 = vmatprep.subr.mxu0 0.0
    %277 = vmatpush1.msra.mxu0 0.0
    %278 = vmatprep.subr.mxu0 0.0
    %279 = vmatpush1.msra.mxu0 0.0
    %280 = vmatprep.subr.mxu0 0.0
    %281 = vmatpush1.msra.mxu0 0.0
    %282 = vmatprep.subr.mxu0 0.0
    %283 = vmatpush1.msra.mxu0 0.0
    %284 = vmatprep.subr.mxu0 0.0
    %285 = vmatpush1.msra.mxu0 0.0
    %286 = vmatprep.subr.mxu0 0.0
    %287 = vmatpush1.msra.mxu0 0.0
    %288 = vmatprep.subr.mxu0 0.0
    %289 = vmatpush1.msra.mxu0 0.0
    %290 = vmatprep.mubr.f32.mxu0 0.0
    %291 = vmatmul.mubr.f32.gmra.mrb[0].mxu0 %v224
    %v292 = vpop.f32.mrb[0].mxu0
    %v293 = vadd.f32 0.0, %v292
    %v294 = vpop.f32.mrb[0].mxu0
    %295 = vdwg.mxu0
    %v297 = vsel %vm222, %v116, 0
    %299 = vmatprep.subr.mxu0 0.0
    %300 = vmatpush1.msra.mxu0 %v220
    %301 = vmatprep.subr.mxu0 0.0
    %302 = vmatpush1.msra.mxu0 0.0
    %303 = vmatprep.subr.mxu0 0.0
    %304 = vmatpush1.msra.mxu0 0.0
    %305 = vmatprep.subr.mxu0 0.0
    %306 = vmatpush1.msra.mxu0 0.0
    %307 = vmatprep.subr.mxu0 0.0
    %308 = vmatpush1.msra.mxu0 0.0
    %309 = vmatprep.subr.mxu0 0.0
    %310 = vmatpush1.msra.mxu0 0.0
    %311 = vmatprep.subr.mxu0 0.0
    %312 = vmatpush1.msra.mxu0 0.0
    %313 = vmatprep.subr.mxu0 0.0
    %314 = vmatpush1.msra.mxu0 0.0
    %315 = vmatprep.subr.mxu0 0.0
    %316 = vmatpush1.msra.mxu0 0.0
    %317 = vmatprep.subr.mxu0 0.0
    %318 = vmatpush1.msra.mxu0 0.0
    %319 = vmatprep.subr.mxu0 0.0
    %320 = vmatpush1.msra.mxu0 0.0
    %321 = vmatprep.subr.mxu0 0.0
    %322 = vmatpush1.msra.mxu0 0.0
    %323 = vmatprep.subr.mxu0 0.0
    %324 = vmatpush1.msra.mxu0 0.0
    %325 = vmatprep.subr.mxu0 0.0
    %326 = vmatpush1.msra.mxu0 0.0
    %327 = vmatprep.subr.mxu0 0.0
    %328 = vmatpush1.msra.mxu0 0.0
    %329 = vmatprep.subr.mxu0 0.0
    %330 = vmatpush1.msra.mxu0 0.0
    %331 = vmatprep.subr.mxu0 0.0
    %332 = vmatpush1.msra.mxu0 0.0
    %333 = vmatprep.subr.mxu0 0.0
    %334 = vmatpush1.msra.mxu0 0.0
    %335 = vmatprep.subr.mxu0 0.0
    %336 = vmatpush1.msra.mxu0 0.0
    %337 = vmatprep.subr.mxu0 0.0
    %338 = vmatpush1.msra.mxu0 0.0
    %339 = vmatprep.subr.mxu0 0.0
    %340 = vmatpush1.msra.mxu0 0.0
    %341 = vmatprep.subr.mxu0 0.0
    %342 = vmatpush1.msra.mxu0 0.0
    %343 = vmatprep.subr.mxu0 0.0
    %344 = vmatpush1.msra.mxu0 0.0
    %345 = vmatprep.subr.mxu0 0.0
    %346 = vmatpush1.msra.mxu0 0.0
    %347 = vmatprep.subr.mxu0 0.0
    %348 = vmatpush1.msra.mxu0 0.0
    %349 = vmatprep.subr.mxu0 0.0
    %350 = vmatpush1.msra.mxu0 0.0
    %351 = vmatprep.subr.mxu0 0.0
    %352 = vmatpush1.msra.mxu0 0.0
    %353 = vmatprep.subr.mxu0 0.0
    %354 = vmatpush1.msra.mxu0 0.0
    %355 = vmatprep.subr.mxu0 0.0
    %356 = vmatpush1.msra.mxu0 0.0
    %357 = vmatprep.subr.mxu0 0.0
    %358 = vmatpush1.msra.mxu0 0.0
    %359 = vmatprep.subr.mxu0 0.0
    %360 = vmatpush1.msra.mxu0 0.0
    %361 = vmatprep.subr.mxu0 0.0
    %362 = vmatpush1.msra.mxu0 0.0
    %363 = vmatprep.mubr.f32.mxu0 0.0
    %364 = vmatmul.mubr.f32.gmra.mrb[0].mxu0 %v297
    %v365 = vpop.f32.mrb[0].mxu0
    %v366 = vadd.f32 %v293, %v365
    %v367 = vpop.f32.mrb[0].mxu0
    %368 = vdwg.mxu0
    %v369 = vld [vmem:[%s1 + $0x10] sm:$0xff]
    %v371 = vsel %vm222, %v12, 0
    %373 = vmatprep.subr.mxu0 0.0
    %374 = vmatpush1.msra.mxu0 %v369
    %375 = vmatprep.subr.mxu0 0.0
    %376 = vmatpush1.msra.mxu0 0.0
    %377 = vmatprep.subr.mxu0 0.0
    %378 = vmatpush1.msra.mxu0 0.0
    %379 = vmatprep.subr.mxu0 0.0
    %380 = vmatpush1.msra.mxu0 0.0
    %381 = vmatprep.subr.mxu0 0.0
    %382 = vmatpush1.msra.mxu0 0.0
    %383 = vmatprep.subr.mxu0 0.0
    %384 = vmatpush1.msra.mxu0 0.0
    %385 = vmatprep.subr.mxu0 0.0
    %386 = vmatpush1.msra.mxu0 0.0
    %387 = vmatprep.subr.mxu0 0.0
    %388 = vmatpush1.msra.mxu0 0.0
    %389 = vmatprep.subr.mxu0 0.0
    %390 = vmatpush1.msra.mxu0 0.0
    %391 = vmatprep.subr.mxu0 0.0
    %392 = vmatpush1.msra.mxu0 0.0
    %393 = vmatprep.subr.mxu0 0.0
    %394 = vmatpush1.msra.mxu0 0.0
    %395 = vmatprep.subr.mxu0 0.0
    %396 = vmatpush1.msra.mxu0 0.0
    %397 = vmatprep.subr.mxu0 0.0
    %398 = vmatpush1.msra.mxu0 0.0
    %399 = vmatprep.subr.mxu0 0.0
    %400 = vmatpush1.msra.mxu0 0.0
    %401 = vmatprep.subr.mxu0 0.0
    %402 = vmatpush1.msra.mxu0 0.0
    %403 = vmatprep.subr.mxu0 0.0
    %404 = vmatpush1.msra.mxu0 0.0
    %405 = vmatprep.subr.mxu0 0.0
    %406 = vmatpush1.msra.mxu0 0.0
    %407 = vmatprep.subr.mxu0 0.0
    %408 = vmatpush1.msra.mxu0 0.0
    %409 = vmatprep.subr.mxu0 0.0
    %410 = vmatpush1.msra.mxu0 0.0
    %411 = vmatprep.subr.mxu0 0.0
    %412 = vmatpush1.msra.mxu0 0.0
    %413 = vmatprep.subr.mxu0 0.0
    %414 = vmatpush1.msra.mxu0 0.0
    %415 = vmatprep.subr.mxu0 0.0
    %416 = vmatpush1.msra.mxu0 0.0
    %417 = vmatprep.subr.mxu0 0.0
    %418 = vmatpush1.msra.mxu0 0.0
    %419 = vmatprep.subr.mxu0 0.0
    %420 = vmatpush1.msra.mxu0 0.0
    %421 = vmatprep.subr.mxu0 0.0
    %422 = vmatpush1.msra.mxu0 0.0
    %423 = vmatprep.subr.mxu0 0.0
    %424 = vmatpush1.msra.mxu0 0.0
    %425 = vmatprep.subr.mxu0 0.0
    %426 = vmatpush1.msra.mxu0 0.0
    %427 = vmatprep.subr.mxu0 0.0
    %428 = vmatpush1.msra.mxu0 0.0
    %429 = vmatprep.subr.mxu0 0.0
    %430 = vmatpush1.msra.mxu0 0.0
    %431 = vmatprep.subr.mxu0 0.0
    %432 = vmatpush1.msra.mxu0 0.0
    %433 = vmatprep.subr.mxu0 0.0
    %434 = vmatpush1.msra.mxu0 0.0
    %435 = vmatprep.subr.mxu0 0.0
    %436 = vmatpush1.msra.mxu0 0.0
    %437 = vmatprep.mubr.f32.mxu0 0.0
    %438 = vmatmul.mubr.f32.gmra.mrb[0].mxu0 %v371
    %v439 = vpop.f32.mrb[0].mxu0
    %v440 = vadd.f32 0.0, %v439
    %v441 = vpop.f32.mrb[0].mxu0
    %442 = vdwg.mxu0
    %v443 = vadd.f32 %v366, %v440
    %v444 = vld [vmem:[%s1 + $0x18] sm:$0x1]
    %v445 = vlaneseq
    %v446 = vshrl.u32 %v445, 7
    %v447 = vsub.s32 0, %v446
    %v448 = vrot.slane %v444, %v447
    %v449 = vadd.f32 %v443, %v448
    %v450 = vmax.f32 %v449, 0.0
    %v451 = vld [vmem:[%s1 + $0x20] sm:$0xff]
    %v452 = vld [vmem:[%s1 + $0x28] sm:$0xff]
    %v453 = vld [vmem:[%s1 + $0x30] sm:$0xff]
    %v454 = vld [vmem:[%s1 + $0x38] sm:$0xff]
    %v455 = vld [vmem:[%s1 + $0x40] sm:$0x1]
    %v456 = vlaneseq
    %v457 = vshrl.u32 %v456, 7
    %v458 = vsub.s32 0, %v457
    %v459 = vrot.slane %v455, %v458
    %vm460 = vcmask 261120
    %v462 = vsel %vm460, %v450, 0
    %464 = vmatprep.subr.mxu0 0.0
    %465 = vmatpush1.msra.mxu0 %v451
    %466 = vmatprep.subr.mxu0 0.0
    %467 = vmatpush1.msra.mxu0 %v452
    %468 = vmatprep.subr.mxu0 0.0
    %469 = vmatpush1.msra.mxu0 %v453
    %470 = vmatprep.subr.mxu0 0.0
    %471 = vmatpush1.msra.mxu0 %v454
    %472 = vmatprep.subr.mxu0 0.0
    %473 = vmatpush1.msra.mxu0 0.0
    %474 = vmatprep.subr.mxu0 0.0
    %475 = vmatpush1.msra.mxu0 0.0
    %476 = vmatprep.subr.mxu0 0.0
    %477 = vmatpush1.msra.mxu0 0.0
    %478 = vmatprep.subr.mxu0 0.0
    %479 = vmatpush1.msra.mxu0 0.0
    %480 = vmatprep.subr.mxu0 0.0
    %481 = vmatpush1.msra.mxu0 0.0
    %482 = vmatprep.subr.mxu0 0.0
    %483 = vmatpush1.msra.mxu0 0.0
    %484 = vmatprep.subr.mxu0 0.0
    %485 = vmatpush1.msra.mxu0 0.0
    %486 = vmatprep.subr.mxu0 0.0
    %487 = vmatpush1.msra.mxu0 0.0
    %488 = vmatprep.subr.mxu0 0.0
    %489 = vmatpush1.msra.mxu0 0.0
    %490 = vmatprep.subr.mxu0 0.0
    %491 = vmatpush1.msra.mxu0 0.0
    %492 = vmatprep.subr.mxu0 0.0
    %493 = vmatpush1.msra.mxu0 0.0
    %494 = vmatprep.subr.mxu0 0.0
    %495 = vmatpush1.msra.mxu0 0.0
    %496 = vmatprep.subr.mxu0 0.0
    %497 = vmatpush1.msra.mxu0 0.0
    %498 = vmatprep.subr.mxu0 0.0
    %499 = vmatpush1.msra.mxu0 0.0
    %500 = vmatprep.subr.mxu0 0.0
    %501 = vmatpush1.msra.mxu0 0.0
    %502 = vmatprep.subr.mxu0 0.0
    %503 = vmatpush1.msra.mxu0 0.0
    %504 = vmatprep.subr.mxu0 0.0
    %505 = vmatpush1.msra.mxu0 0.0
    %506 = vmatprep.subr.mxu0 0.0
    %507 = vmatpush1.msra.mxu0 0.0
    %508 = vmatprep.subr.mxu0 0.0
    %509 = vmatpush1.msra.mxu0 0.0
    %510 = vmatprep.subr.mxu0 0.0
    %511 = vmatpush1.msra.mxu0 0.0
    %512 = vmatprep.subr.mxu0 0.0
    %513 = vmatpush1.msra.mxu0 0.0
    %514 = vmatprep.subr.mxu0 0.0
    %515 = vmatpush1.msra.mxu0 0.0
    %516 = vmatprep.subr.mxu0 0.0
    %517 = vmatpush1.msra.mxu0 0.0
    %518 = vmatprep.subr.mxu0 0.0
    %519 = vmatpush1.msra.mxu0 0.0
    %520 = vmatprep.subr.mxu0 0.0
    %521 = vmatpush1.msra.mxu0 0.0
    %522 = vmatprep.subr.mxu0 0.0
    %523 = vmatpush1.msra.mxu0 0.0
    %524 = vmatprep.subr.mxu0 0.0
    %525 = vmatpush1.msra.mxu0 0.0
    %526 = vmatprep.subr.mxu0 0.0
    %527 = vmatpush1.msra.mxu0 0.0
    %528 = vmatprep.mubr.f32.mxu0 0.0
    %529 = vmatmul.mubr.f32.gmra.mrb[0].mxu0 %v462
    %v530 = vpop.f32.mrb[0].mxu0
    %v531 = vadd.f32 %v459, %v530
    %v532 = vpop.f32.mrb[0].mxu0
    %533 = vdwg.mxu0
    %v534 = vmax.f32 %v531, 0.0
    %v535 = vld [vmem:[%s1 + $0x48] sm:$0xff]
    %v536 = vld [vmem:[%s1 + $0x50] sm:$0xff]
    %v537 = vld [vmem:[%s1 + $0x58] sm:$0xff]
    %v538 = vld [vmem:[%s1 + $0x60] sm:$0xff]
    %v539 = vld [vmem:[%s1 + $0x68] sm:$0x1]
    %v540 = vlaneseq
    %v541 = vshrl.u32 %v540, 7
    %v542 = vsub.s32 0, %v541
    %v543 = vrot.slane %v539, %v542
    %v545 = vsel %vm460, %v534, 0
    %547 = vmatprep.subr.mxu0 0.0
    %548 = vmatpush1.msra.mxu0 %v535
    %549 = vmatprep.subr.mxu0 0.0
    %550 = vmatpush1.msra.mxu0 %v536
    %551 = vmatprep.subr.mxu0 0.0
    %552 = vmatpush1.msra.mxu0 %v537
    %553 = vmatprep.subr.mxu0 0.0
    %554 = vmatpush1.msra.mxu0 %v538
    %555 = vmatprep.subr.mxu0 0.0
    %556 = vmatpush1.msra.mxu0 0.0
    %557 = vmatprep.subr.mxu0 0.0
    %558 = vmatpush1.msra.mxu0 0.0
    %559 = vmatprep.subr.mxu0 0.0
    %560 = vmatpush1.msra.mxu0 0.0
    %561 = vmatprep.subr.mxu0 0.0
    %562 = vmatpush1.msra.mxu0 0.0
    %563 = vmatprep.subr.mxu0 0.0
    %564 = vmatpush1.msra.mxu0 0.0
    %565 = vmatprep.subr.mxu0 0.0
    %566 = vmatpush1.msra.mxu0 0.0
    %567 = vmatprep.subr.mxu0 0.0
    %568 = vmatpush1.msra.mxu0 0.0
    %569 = vmatprep.subr.mxu0 0.0
    %570 = vmatpush1.msra.mxu0 0.0
    %571 = vmatprep.subr.mxu0 0.0
    %572 = vmatpush1.msra.mxu0 0.0
    %573 = vmatprep.subr.mxu0 0.0
    %574 = vmatpush1.msra.mxu0 0.0
    %575 = vmatprep.subr.mxu0 0.0
    %576 = vmatpush1.msra.mxu0 0.0
    %577 = vmatprep.subr.mxu0 0.0
    %578 = vmatpush1.msra.mxu0 0.0
    %579 = vmatprep.subr.mxu0 0.0
    %580 = vmatpush1.msra.mxu0 0.0
    %581 = vmatprep.subr.mxu0 0.0
    %582 = vmatpush1.msra.mxu0 0.0
    %583 = vmatprep.subr.mxu0 0.0
    %584 = vmatpush1.msra.mxu0 0.0
    %585 = vmatprep.subr.mxu0 0.0
    %586 = vmatpush1.msra.mxu0 0.0
    %587 = vmatprep.subr.mxu0 0.0
    %588 = vmatpush1.msra.mxu0 0.0
    %589 = vmatprep.subr.mxu0 0.0
    %590 = vmatpush1.msra.mxu0 0.0
    %591 = vmatprep.subr.mxu0 0.0
    %592 = vmatpush1.msra.mxu0 0.0
    %593 = vmatprep.subr.mxu0 0.0
    %594 = vmatpush1.msra.mxu0 0.0
    %595 = vmatprep.subr.mxu0 0.0
    %596 = vmatpush1.msra.mxu0 0.0
    %597 = vmatprep.subr.mxu0 0.0
    %598 = vmatpush1.msra.mxu0 0.0
    %599 = vmatprep.subr.mxu0 0.0
    %600 = vmatpush1.msra.mxu0 0.0
    %601 = vmatprep.subr.mxu0 0.0
    %602 = vmatpush1.msra.mxu0 0.0
    %603 = vmatprep.subr.mxu0 0.0
    %604 = vmatpush1.msra.mxu0 0.0
    %605 = vmatprep.subr.mxu0 0.0
    %606 = vmatpush1.msra.mxu0 0.0
    %607 = vmatprep.subr.mxu0 0.0
    %608 = vmatpush1.msra.mxu0 0.0
    %609 = vmatprep.subr.mxu0 0.0
    %610 = vmatpush1.msra.mxu0 0.0
    %611 = vmatprep.mubr.f32.mxu0 0.0
    %612 = vmatmul.mubr.f32.gmra.mrb[0].mxu0 %v545
    %v613 = vpop.f32.mrb[0].mxu0
    %v614 = vadd.f32 %v543, %v613
    %v615 = vpop.f32.mrb[0].mxu0
    %616 = vdwg.mxu0
    %v617 = vadd.f32 %v12, %v614
    %v618 = vand.u32 2147483647, %v617
    %vm619 = vcmp.le.f32.partialorder %v618, 0.7853982
    %vm620 = vcmp.lt.s32.totalorder %v617, 0
    %v621 = vand.u32 %v617, 2139095040
    %v622 = vshrl.u32 %v621, 23
    %v623 = vsub.s32 %v622, 127
    %v624 = vand.u32 2147483647, %v617
    %v625 = vand.u32 %v624, 8388607
    %v626 = vor.u32 %v625, 8388608
    %v627 = vsub.s32 0, %v626
    %v628 = vadd.s32 %v623, 1
    %vm629 = vcmp.gt.s32.totalorder %v628, 0
    %v630 = vsel %vm629, %v628, 0
    %v631 = vshrl.u32 %v630, 5
    %v632 = vand.u32 %v630, 31
    %v633 = vsub.s32 32, %v632
    %v634 = vshrl.u32 683565275, %v633
    %v635 = vshll.u32 683565275, %v632
    %v636 = vshrl.u32 2475754826, %v633
    %v637 = vor.u32 %v635, %v636
    %v638 = vshll.u32 2475754826, %v632
    %v639 = vshrl.u32 2131351028, %v633
    %v640 = vor.u32 %v638, %v639
    %v641 = vshll.u32 2131351028, %v632
    %v642 = vshrl.u32 2102212464, %v633
    %v643 = vor.u32 %v641, %v642
    %v644 = vshll.u32 2102212464, %v632
    %v645 = vshrl.u32 920167782, %v633
    %v646 = vor.u32 %v644, %v645
    %v647 = vshll.u32 920167782, %v632
    %v648 = vshrl.u32 1326507024, %v633
    %v649 = vor.u32 %v647, %v648
    %vm650 = vcmp.lt.s32.totalorder %v631, 1
    %vm651 = vcmp.lt.s32.totalorder %v631, 2
    %vm652 = vcmp.lt.s32.totalorder %v631, 3
    %vm653 = vcmp.lt.s32.totalorder %v631, 4
    %v654 = vsel %vm650, %v634, %v637
    %v655 = vsel %vm653, %v643, 2102212464
    %v656 = vsel %vm652, %v640, %v655
    %v657 = vsel %vm651, %v654, %v656
    %v658 = vsel %vm650, %v637, %v640
    %v659 = vsel %vm653, %v646, 920167782
    %v660 = vsel %vm652, %v643, %v659
    %v661 = vsel %vm651, %v658, %v660
    %v662 = vsel %vm650, %v640, %v643
    %v663 = vsel %vm653, %v649, 1326507024
    %v664 = vsel %vm652, %v646, %v663
    %v665 = vsel %vm651, %v662, %v664
    %v666 = vshll.u32 %v626, 8
    %v667 = vmul.u32.u64.compose %v666, %v665
    %v668 = vextract.low.u32 %v667
    %v669 = vextract.high.u32 %v667
    %v670 = vmul.u32.u64.compose %v666, %v661
    %v671 = vextract.low.u32 %v670
    %v672 = vextract.high.u32 %v670
    %v673 = vmul.u32 %v666, %v657
    %v674 = vadd.s32 %v669, %v671
    %vm675 = vc.u32 %v669, %v671
    %v676 = vadd.s32 %v672, 1
    %v677 = vsel %vm675, %v676, %v672
    %v678 = vadd.s32 %v673, %v677
    %v679 = vadd.s32 %v678, 536870912
    %v680 = vshrl.u32 %v679, 30
    %v681 = vshll.u32 %v680, 30
    %v682 = vsub.s32 %v678, %v681
    %vm683 = vcmp.lt.s32.totalorder %v682, 0
    %v684 = vsub.s32 0, %v682
    %v685 = vsel %vm683, %v684, %v682
    %v686 = vclz %v685
    %v687 = vsub.s32 %v686, 2
    %vm688 = vcmp.gt.s32.totalorder 0, %v687
    %v689 = vsel %vm688, 0, %v687
    %v690 = vsub.s32 32, %v689
    %v691 = vshll.u32 %v682, %v689
    %v692 = vshrl.u32 %v674, %v690
    %v693 = vor.u32 %v691, %v692
    %v694 = vsub.s32 4294967266, %v689
    %v695 = vadd.s32 %v694, 127
    %v696 = vshll.u32 %v695, 23
    %v697 = vor.u32 4788187, %v696
    %v698 = vand.u32 2147483647, %v697
    %v700 = vcvt.s32.f32 %v693
    %v701 = vmul.f32 %v700, %v698
    %v702 = vxor.u32 %v701, 2147483648
    %v703 = vsel %vm620, %v702, %v701
    %v704 = vsub.s32 4, %v680
    %v705 = vsel %vm620, %v704, %v680
    %v706 = vsel %vm619, %v617, %v703
    %v707 = vsel %vm619, 0, %v705
    %v708 = vcosq.f32.pop %v706
    %v709 = vsinq.f32.pop %v706
    %vm710 = vweird.f32 %v617
    %v711 = vadd.s32 %v707, 3
    %v712 = vand.u32 %v711, 3
    %vm713 = vcmp.lt.s32.totalorder %v712, 2
    %vm714 = vcmp.eq.s32.totalorder %v712, 0
    %v715 = vxor.u32 %v709, 2147483648
    %v716 = vsel %vm714, %v708, %v715
    %vm717 = vcmp.eq.s32.totalorder %v712, 2
    %v718 = vxor.u32 %v708, 2147483648
    %v719 = vsel %vm717, %v718, %v709
    %v720 = vsel %vm713, %v716, %v719
    %v721 = vsel %vm710, nan, %v720
    %v722 = vand.u32 2147483647, %v617
    %vm723 = vcmp.le.f32.partialorder %v722, 0.7853982
    %vm724 = vcmp.lt.s32.totalorder %v617, 0
    %v725 = vand.u32 %v617, 2139095040
    %v726 = vshrl.u32 %v725, 23
    %v727 = vsub.s32 %v726, 127
    %v728 = vand.u32 2147483647, %v617
    %v729 = vand.u32 %v728, 8388607
    %v730 = vor.u32 %v729, 8388608
    %v731 = vsub.s32 0, %v730
    %v732 = vadd.s32 %v727, 1
    %vm733 = vcmp.gt.s32.totalorder %v732, 0
    %v734 = vsel %vm733, %v732, 0
    %v735 = vshrl.u32 %v734, 5
    %v736 = vand.u32 %v734, 31
    %v737 = vsub.s32 32, %v736
    %v738 = vshrl.u32 683565275, %v737
    %v739 = vshll.u32 683565275, %v736
    %v740 = vshrl.u32 2475754826, %v737
    %v741 = vor.u32 %v739, %v740
    %v742 = vshll.u32 2475754826, %v736
    %v743 = vshrl.u32 2131351028, %v737
    %v744 = vor.u32 %v742, %v743
    %v745 = vshll.u32 2131351028, %v736
    %v746 = vshrl.u32 2102212464, %v737
    %v747 = vor.u32 %v745, %v746
    %v748 = vshll.u32 2102212464, %v736
    %v749 = vshrl.u32 920167782, %v737
    %v750 = vor.u32 %v748, %v749
    %v751 = vshll.u32 920167782, %v736
    %v752 = vshrl.u32 1326507024, %v737
    %v753 = vor.u32 %v751, %v752
    %vm754 = vcmp.lt.s32.totalorder %v735, 1
    %vm755 = vcmp.lt.s32.totalorder %v735, 2
    %vm756 = vcmp.lt.s32.totalorder %v735, 3
    %vm757 = vcmp.lt.s32.totalorder %v735, 4
    %v758 = vsel %vm754, %v738, %v741
    %v759 = vsel %vm757, %v747, 2102212464
    %v760 = vsel %vm756, %v744, %v759
    %v761 = vsel %vm755, %v758, %v760
    %v762 = vsel %vm754, %v741, %v744
    %v763 = vsel %vm757, %v750, 920167782
    %v764 = vsel %vm756, %v747, %v763
    %v765 = vsel %vm755, %v762, %v764
    %v766 = vsel %vm754, %v744, %v747
    %v767 = vsel %vm757, %v753, 1326507024
    %v768 = vsel %vm756, %v750, %v767
    %v769 = vsel %vm755, %v766, %v768
    %v770 = vshll.u32 %v730, 8
    %v771 = vmul.u32.u64.compose %v770, %v769
    %v772 = vextract.low.u32 %v771
    %v773 = vextract.high.u32 %v771
    %v774 = vmul.u32.u64.compose %v770, %v765
    %v775 = vextract.low.u32 %v774
    %v776 = vextract.high.u32 %v774
    %v777 = vmul.u32 %v770, %v761
    %v778 = vadd.s32 %v773, %v775
    %vm779 = vc.u32 %v773, %v775
    %v780 = vadd.s32 %v776, 1
    %v781 = vsel %vm779, %v780, %v776
    %v782 = vadd.s32 %v777, %v781
    %v783 = vadd.s32 %v782, 536870912
    %v784 = vshrl.u32 %v783, 30
    %v785 = vshll.u32 %v784, 30
    %v786 = vsub.s32 %v782, %v785
    %vm787 = vcmp.lt.s32.totalorder %v786, 0
    %v788 = vsub.s32 0, %v786
    %v789 = vsel %vm787, %v788, %v786
    %v790 = vclz %v789
    %v791 = vsub.s32 %v790, 2
    %vm792 = vcmp.gt.s32.totalorder 0, %v791
    %v793 = vsel %vm792, 0, %v791
    %v794 = vsub.s32 32, %v793
    %v795 = vshll.u32 %v786, %v793
    %v796 = vshrl.u32 %v778, %v794
    %v797 = vor.u32 %v795, %v796
    %v798 = vsub.s32 4294967266, %v793
    %v799 = vadd.s32 %v798, 127
    %v800 = vshll.u32 %v799, 23
    %v801 = vor.u32 4788187, %v800
    %v802 = vand.u32 2147483647, %v801
    %v804 = vcvt.s32.f32 %v797
    %v805 = vmul.f32 %v804, %v802
    %v806 = vxor.u32 %v805, 2147483648
    %v807 = vsel %vm724, %v806, %v805
    %v808 = vsub.s32 4, %v784
    %v809 = vsel %vm724, %v808, %v784
    %v810 = vsel %vm723, %v617, %v807
    %v811 = vsel %vm723, 0, %v809
    %v812 = vcosq.f32.pop %v810
    %v813 = vsinq.f32.pop %v810
    %vm814 = vweird.f32 %v617
    %v815 = vand.u32 %v811, 3
    %vm816 = vcmp.lt.s32.totalorder %v815, 2
    %vm817 = vcmp.eq.s32.totalorder %v815, 0
    %v818 = vxor.u32 %v813, 2147483648
    %v819 = vsel %vm817, %v812, %v818
    %vm820 = vcmp.eq.s32.totalorder %v815, 2
    %v821 = vxor.u32 %v812, 2147483648
    %v822 = vsel %vm820, %v821, %v813
    %v823 = vsel %vm816, %v819, %v822
    %v824 = vsel %vm814, nan, %v823
    %v825 = vld [vmem:[%s1 + $0x70] sm:$0xff]
    %v826 = vld [vmem:[%s1 + $0x78] sm:$0xff]
    %v828 = vsel %vm222, %v824, 0
    %830 = vmatprep.subr.mxu0 0.0
    %831 = vmatpush1.msra.mxu0 %v826
    %832 = vmatprep.subr.mxu0 0.0
    %833 = vmatpush1.msra.mxu0 0.0
    %834 = vmatprep.subr.mxu0 0.0
    %835 = vmatpush1.msra.mxu0 0.0
    %836 = vmatprep.subr.mxu0 0.0
    %837 = vmatpush1.msra.mxu0 0.0
    %838 = vmatprep.subr.mxu0 0.0
    %839 = vmatpush1.msra.mxu0 0.0
    %840 = vmatprep.subr.mxu0 0.0
    %841 = vmatpush1.msra.mxu0 0.0
    %842 = vmatprep.subr.mxu0 0.0
    %843 = vmatpush1.msra.mxu0 0.0
    %844 = vmatprep.subr.mxu0 0.0
    %845 = vmatpush1.msra.mxu0 0.0
    %846 = vmatprep.subr.mxu0 0.0
    %847 = vmatpush1.msra.mxu0 0.0
    %848 = vmatprep.subr.mxu0 0.0
    %849 = vmatpush1.msra.mxu0 0.0
    %850 = vmatprep.subr.mxu0 0.0
    %851 = vmatpush1.msra.mxu0 0.0
    %852 = vmatprep.subr.mxu0 0.0
    %853 = vmatpush1.msra.mxu0 0.0
    %854 = vmatprep.subr.mxu0 0.0
    %855 = vmatpush1.msra.mxu0 0.0
    %856 = vmatprep.subr.mxu0 0.0
    %857 = vmatpush1.msra.mxu0 0.0
    %858 = vmatprep.subr.mxu0 0.0
    %859 = vmatpush1.msra.mxu0 0.0
    %860 = vmatprep.subr.mxu0 0.0
    %861 = vmatpush1.msra.mxu0 0.0
    %862 = vmatprep.subr.mxu0 0.0
    %863 = vmatpush1.msra.mxu0 0.0
    %864 = vmatprep.subr.mxu0 0.0
    %865 = vmatpush1.msra.mxu0 0.0
    %866 = vmatprep.subr.mxu0 0.0
    %867 = vmatpush1.msra.mxu0 0.0
    %868 = vmatprep.subr.mxu0 0.0
    %869 = vmatpush1.msra.mxu0 0.0
    %870 = vmatprep.subr.mxu0 0.0
    %871 = vmatpush1.msra.mxu0 0.0
    %872 = vmatprep.subr.mxu0 0.0
    %873 = vmatpush1.msra.mxu0 0.0
    %874 = vmatprep.subr.mxu0 0.0
    %875 = vmatpush1.msra.mxu0 0.0
    %876 = vmatprep.subr.mxu0 0.0
    %877 = vmatpush1.msra.mxu0 0.0
    %878 = vmatprep.subr.mxu0 0.0
    %879 = vmatpush1.msra.mxu0 0.0
    %880 = vmatprep.subr.mxu0 0.0
    %881 = vmatpush1.msra.mxu0 0.0
    %882 = vmatprep.subr.mxu0 0.0
    %883 = vmatpush1.msra.mxu0 0.0
    %884 = vmatprep.subr.mxu0 0.0
    %885 = vmatpush1.msra.mxu0 0.0
    %886 = vmatprep.subr.mxu0 0.0
    %887 = vmatpush1.msra.mxu0 0.0
    %888 = vmatprep.subr.mxu0 0.0
    %889 = vmatpush1.msra.mxu0 0.0
    %890 = vmatprep.subr.mxu0 0.0
    %891 = vmatpush1.msra.mxu0 0.0
    %892 = vmatprep.subr.mxu0 0.0
    %893 = vmatpush1.msra.mxu0 0.0
    %894 = vmatprep.mubr.f32.mxu0 0.0
    %895 = vmatmul.mubr.f32.gmra.mrb[0].mxu0 %v828
    %v896 = vpop.f32.mrb[0].mxu0
    %v897 = vadd.f32 0.0, %v896
    %v898 = vpop.f32.mrb[0].mxu0
    %899 = vdwg.mxu0
    %v901 = vsel %vm222, %v721, 0
    %903 = vmatprep.subr.mxu0 0.0
    %904 = vmatpush1.msra.mxu0 %v825
    %905 = vmatprep.subr.mxu0 0.0
    %906 = vmatpush1.msra.mxu0 0.0
    %907 = vmatprep.subr.mxu0 0.0
    %908 = vmatpush1.msra.mxu0 0.0
    %909 = vmatprep.subr.mxu0 0.0
    %910 = vmatpush1.msra.mxu0 0.0
    %911 = vmatprep.subr.mxu0 0.0
    %912 = vmatpush1.msra.mxu0 0.0
    %913 = vmatprep.subr.mxu0 0.0
    %914 = vmatpush1.msra.mxu0 0.0
    %915 = vmatprep.subr.mxu0 0.0
    %916 = vmatpush1.msra.mxu0 0.0
    %917 = vmatprep.subr.mxu0 0.0
    %918 = vmatpush1.msra.mxu0 0.0
    %919 = vmatprep.subr.mxu0 0.0
    %920 = vmatpush1.msra.mxu0 0.0
    %921 = vmatprep.subr.mxu0 0.0
    %922 = vmatpush1.msra.mxu0 0.0
    %923 = vmatprep.subr.mxu0 0.0
    %924 = vmatpush1.msra.mxu0 0.0
    %925 = vmatprep.subr.mxu0 0.0
    %926 = vmatpush1.msra.mxu0 0.0
    %927 = vmatprep.subr.mxu0 0.0
    %928 = vmatpush1.msra.mxu0 0.0
    %929 = vmatprep.subr.mxu0 0.0
    %930 = vmatpush1.msra.mxu0 0.0
    %931 = vmatprep.subr.mxu0 0.0
    %932 = vmatpush1.msra.mxu0 0.0
    %933 = vmatprep.subr.mxu0 0.0
    %934 = vmatpush1.msra.mxu0 0.0
    %935 = vmatprep.subr.mxu0 0.0
    %936 = vmatpush1.msra.mxu0 0.0
    %937 = vmatprep.subr.mxu0 0.0
    %938 = vmatpush1.msra.mxu0 0.0
    %939 = vmatprep.subr.mxu0 0.0
    %940 = vmatpush1.msra.mxu0 0.0
    %941 = vmatprep.subr.mxu0 0.0
    %942 = vmatpush1.msra.mxu0 0.0
    %943 = vmatprep.subr.mxu0 0.0
    %944 = vmatpush1.msra.mxu0 0.0
    %945 = vmatprep.subr.mxu0 0.0
    %946 = vmatpush1.msra.mxu0 0.0
    %947 = vmatprep.subr.mxu0 0.0
    %948 = vmatpush1.msra.mxu0 0.0
    %949 = vmatprep.subr.mxu0 0.0
    %950 = vmatpush1.msra.mxu0 0.0
    %951 = vmatprep.subr.mxu0 0.0
    %952 = vmatpush1.msra.mxu0 0.0
    %953 = vmatprep.subr.mxu0 0.0
    %954 = vmatpush1.msra.mxu0 0.0
    %955 = vmatprep.subr.mxu0 0.0
    %956 = vmatpush1.msra.mxu0 0.0
    %957 = vmatprep.subr.mxu0 0.0
    %958 = vmatpush1.msra.mxu0 0.0
    %959 = vmatprep.subr.mxu0 0.0
    %960 = vmatpush1.msra.mxu0 0.0
    %961 = vmatprep.subr.mxu0 0.0
    %962 = vmatpush1.msra.mxu0 0.0
    %963 = vmatprep.subr.mxu0 0.0
    %964 = vmatpush1.msra.mxu0 0.0
    %965 = vmatprep.subr.mxu0 0.0
    %966 = vmatpush1.msra.mxu0 0.0
    %967 = vmatprep.mubr.f32.mxu0 0.0
    %968 = vmatmul.mubr.f32.gmra.mrb[0].mxu0 %v901
    %v969 = vpop.f32.mrb[0].mxu0
    %v970 = vadd.f32 %v897, %v969
    %v971 = vpop.f32.mrb[0].mxu0
    %972 = vdwg.mxu0
    %v973 = vld [vmem:[%s1 + $0x80] sm:$0x1]
    %v974 = vlaneseq
    %v975 = vshrl.u32 %v974, 7
    %v976 = vsub.s32 0, %v975
    %v977 = vrot.slane %v973, %v976
    %v978 = vadd.f32 %v970, %v977
    %v979 = vmax.f32 %v978, 0.0
    %v980 = vld [vmem:[%s1 + $0x88] sm:$0xff]
    %v981 = vld [vmem:[%s1 + $0x90] sm:$0xff]
    %v982 = vld [vmem:[%s1 + $0x98] sm:$0xff]
    %v983 = vld [vmem:[%s1 + $0xa0] sm:$0xff]
    %v984 = vld [vmem:[%s1 + $0xa8] sm:$0x1]
    %v985 = vlaneseq
    %v986 = vshrl.u32 %v985, 7
    %v987 = vsub.s32 0, %v986
    %v988 = vrot.slane %v984, %v987
    %v990 = vsel %vm460, %v979, 0
    %992 = vmatprep.subr.mxu0 0.0
    %993 = vmatpush1.msra.mxu0 %v980
    %994 = vmatprep.subr.mxu0 0.0
    %995 = vmatpush1.msra.mxu0 %v981
    %996 = vmatprep.subr.mxu0 0.0
    %997 = vmatpush1.msra.mxu0 %v982
    %998 = vmatprep.subr.mxu0 0.0
    %999 = vmatpush1.msra.mxu0 %v983
    %1000 = vmatprep.subr.mxu0 0.0
    %1001 = vmatpush1.msra.mxu0 0.0
    %1002 = vmatprep.subr.mxu0 0.0
    %1003 = vmatpush1.msra.mxu0 0.0
    %1004 = vmatprep.subr.mxu0 0.0
    %1005 = vmatpush1.msra.mxu0 0.0
    %1006 = vmatprep.subr.mxu0 0.0
    %1007 = vmatpush1.msra.mxu0 0.0
    %1008 = vmatprep.subr.mxu0 0.0
    %1009 = vmatpush1.msra.mxu0 0.0
    %1010 = vmatprep.subr.mxu0 0.0
    %1011 = vmatpush1.msra.mxu0 0.0
    %1012 = vmatprep.subr.mxu0 0.0
    %1013 = vmatpush1.msra.mxu0 0.0
    %1014 = vmatprep.subr.mxu0 0.0
    %1015 = vmatpush1.msra.mxu0 0.0
    %1016 = vmatprep.subr.mxu0 0.0
    %1017 = vmatpush1.msra.mxu0 0.0
    %1018 = vmatprep.subr.mxu0 0.0
    %1019 = vmatpush1.msra.mxu0 0.0
    %1020 = vmatprep.subr.mxu0 0.0
    %1021 = vmatpush1.msra.mxu0 0.0
    %1022 = vmatprep.subr.mxu0 0.0
    %1023 = vmatpush1.msra.mxu0 0.0
    %1024 = vmatprep.subr.mxu0 0.0
    %1025 = vmatpush1.msra.mxu0 0.0
    %1026 = vmatprep.subr.mxu0 0.0
    %1027 = vmatpush1.msra.mxu0 0.0
    %1028 = vmatprep.subr.mxu0 0.0
    %1029 = vmatpush1.msra.mxu0 0.0
    %1030 = vmatprep.subr.mxu0 0.0
    %1031 = vmatpush1.msra.mxu0 0.0
    %1032 = vmatprep.subr.mxu0 0.0
    %1033 = vmatpush1.msra.mxu0 0.0
    %1034 = vmatprep.subr.mxu0 0.0
    %1035 = vmatpush1.msra.mxu0 0.0
    %1036 = vmatprep.subr.mxu0 0.0
    %1037 = vmatpush1.msra.mxu0 0.0
    %1038 = vmatprep.subr.mxu0 0.0
    %1039 = vmatpush1.msra.mxu0 0.0
    %1040 = vmatprep.subr.mxu0 0.0
    %1041 = vmatpush1.msra.mxu0 0.0
    %1042 = vmatprep.subr.mxu0 0.0
    %1043 = vmatpush1.msra.mxu0 0.0
    %1044 = vmatprep.subr.mxu0 0.0
    %1045 = vmatpush1.msra.mxu0 0.0
    %1046 = vmatprep.subr.mxu0 0.0
    %1047 = vmatpush1.msra.mxu0 0.0
    %1048 = vmatprep.subr.mxu0 0.0
    %1049 = vmatpush1.msra.mxu0 0.0
    %1050 = vmatprep.subr.mxu0 0.0
    %1051 = vmatpush1.msra.mxu0 0.0
    %1052 = vmatprep.subr.mxu0 0.0
    %1053 = vmatpush1.msra.mxu0 0.0
    %1054 = vmatprep.subr.mxu0 0.0
    %1055 = vmatpush1.msra.mxu0 0.0
    %1056 = vmatprep.mubr.f32.mxu0 0.0
    %1057 = vmatmul.mubr.f32.gmra.mrb[0].mxu0 %v990
    %v1058 = vpop.f32.mrb[0].mxu0
    %v1059 = vadd.f32 %v988, %v1058
    %v1060 = vpop.f32.mrb[0].mxu0
    %1061 = vdwg.mxu0
    %v1062 = vmax.f32 %v1059, 0.0
    %v1063 = vld [vmem:[%s1 + $0xb0] sm:$0xff]
    %v1064 = vld [vmem:[%s1 + $0xb8] sm:$0xff]
    %v1065 = vld [vmem:[%s1 + $0xc0] sm:$0xff]
    %v1066 = vld [vmem:[%s1 + $0xc8] sm:$0xff]
    %v1067 = vld [vmem:[%s1 + $0xd0] sm:$0x1]
    %v1068 = vlaneseq
    %v1069 = vshrl.u32 %v1068, 7
    %v1070 = vsub.s32 0, %v1069
    %v1071 = vrot.slane %v1067, %v1070
    %v1073 = vsel %vm460, %v1062, 0
    %1075 = vmatprep.subr.mxu0 0.0
    %1076 = vmatpush1.msra.mxu0 %v1063
    %1077 = vmatprep.subr.mxu0 0.0
    %1078 = vmatpush1.msra.mxu0 %v1064
    %1079 = vmatprep.subr.mxu0 0.0
    %1080 = vmatpush1.msra.mxu0 %v1065
    %1081 = vmatprep.subr.mxu0 0.0
    %1082 = vmatpush1.msra.mxu0 %v1066
    %1083 = vmatprep.subr.mxu0 0.0
    %1084 = vmatpush1.msra.mxu0 0.0
    %1085 = vmatprep.subr.mxu0 0.0
    %1086 = vmatpush1.msra.mxu0 0.0
    %1087 = vmatprep.subr.mxu0 0.0
    %1088 = vmatpush1.msra.mxu0 0.0
    %1089 = vmatprep.subr.mxu0 0.0
    %1090 = vmatpush1.msra.mxu0 0.0
    %1091 = vmatprep.subr.mxu0 0.0
    %1092 = vmatpush1.msra.mxu0 0.0
    %1093 = vmatprep.subr.mxu0 0.0
    %1094 = vmatpush1.msra.mxu0 0.0
    %1095 = vmatprep.subr.mxu0 0.0
    %1096 = vmatpush1.msra.mxu0 0.0
    %1097 = vmatprep.subr.mxu0 0.0
    %1098 = vmatpush1.msra.mxu0 0.0
    %1099 = vmatprep.subr.mxu0 0.0
    %1100 = vmatpush1.msra.mxu0 0.0
    %1101 = vmatprep.subr.mxu0 0.0
    %1102 = vmatpush1.msra.mxu0 0.0
    %1103 = vmatprep.subr.mxu0 0.0
    %1104 = vmatpush1.msra.mxu0 0.0
    %1105 = vmatprep.subr.mxu0 0.0
    %1106 = vmatpush1.msra.mxu0 0.0
    %1107 = vmatprep.subr.mxu0 0.0
    %1108 = vmatpush1.msra.mxu0 0.0
    %1109 = vmatprep.subr.mxu0 0.0
    %1110 = vmatpush1.msra.mxu0 0.0
    %1111 = vmatprep.subr.mxu0 0.0
    %1112 = vmatpush1.msra.mxu0 0.0
    %1113 = vmatprep.subr.mxu0 0.0
    %1114 = vmatpush1.msra.mxu0 0.0
    %1115 = vmatprep.subr.mxu0 0.0
    %1116 = vmatpush1.msra.mxu0 0.0
    %1117 = vmatprep.subr.mxu0 0.0
    %1118 = vmatpush1.msra.mxu0 0.0
    %1119 = vmatprep.subr.mxu0 0.0
    %1120 = vmatpush1.msra.mxu0 0.0
    %1121 = vmatprep.subr.mxu0 0.0
    %1122 = vmatpush1.msra.mxu0 0.0
    %1123 = vmatprep.subr.mxu0 0.0
    %1124 = vmatpush1.msra.mxu0 0.0
    %1125 = vmatprep.subr.mxu0 0.0
    %1126 = vmatpush1.msra.mxu0 0.0
    %1127 = vmatprep.subr.mxu0 0.0
    %1128 = vmatpush1.msra.mxu0 0.0
    %1129 = vmatprep.subr.mxu0 0.0
    %1130 = vmatpush1.msra.mxu0 0.0
    %1131 = vmatprep.subr.mxu0 0.0
    %1132 = vmatpush1.msra.mxu0 0.0
    %1133 = vmatprep.subr.mxu0 0.0
    %1134 = vmatpush1.msra.mxu0 0.0
    %1135 = vmatprep.subr.mxu0 0.0
    %1136 = vmatpush1.msra.mxu0 0.0
    %1137 = vmatprep.subr.mxu0 0.0
    %1138 = vmatpush1.msra.mxu0 0.0
    %1139 = vmatprep.mubr.f32.mxu0 0.0
    %1140 = vmatmul.mubr.f32.gmra.mrb[0].mxu0 %v1073
    %v1141 = vpop.f32.mrb[0].mxu0
    %v1142 = vadd.f32 %v1071, %v1141
    %v1143 = vpop.f32.mrb[0].mxu0
    %1144 = vdwg.mxu0
    %v1145 = vlaneseq
    %v1146 = vand.u32 %v1145, 127
    %vm1147 = vcmp.lt.s32.totalorder %v1146, 4
    %v1148 = vsel %vm1147, %v617, %v1142
    %1149 = vst.msk [vmem:[#allocation2] sm:$0xff] %vm222, %v1148
    // Predicated region
    $region10: #{tpu_custom_call.1} parent=1 // pred_check
      _
    $region11: #{tpu_custom_call.1} parent=1 // pred_check_branch
      %1151 = sbr.rel (0) target = $region13
    $region12: #{tpu_custom_call.1} parent=1 // pred_region
      %s1153 = ssub.s32 128, 128
      %1154 = vsyncadd [#allocation3], %s1153
      %s1156 = sshll.u32 [#allocation2], 4
      %s1157 = int_to_ptr.vmem [resolvable:$true] %s1156
      %1159 = dma.vmem_to_hbm [thread:$0]  %s1157, 128, %s2, [#allocation3]
    $region13: #{tpu_custom_call.1} parent=1 // pred_fallthru
      _
    // Predicated region
    $region14: #{tpu_custom_call.1} parent=1 // pred_check
      _
    $region15: #{tpu_custom_call.1} parent=1 // pred_check_branch
      %1161 = sbr.rel (0) target = $region17
    $region16: #{tpu_custom_call.1} parent=1 // pred_region
      %1162 = dma.done [#allocation3], 128
    $region17: #{tpu_custom_call.1} parent=1 // pred_fallthru
      _
    %1163 = vsyncpa [#allocation3], 1

</llo_original>
